<compile_context>
chip_gen: v5e
topology: v5e:2x2
jax: 0.10.0
libtpu: 0.0.40
codegen_flags: <defaults>
</compile_context>

<pallas_src>
import math

import jax
import jax.numpy as jnp
import numpy as np
from jax.experimental import pallas as pl
from jax.experimental.pallas import tpu as pltpu


def _pcaf_cosine_schedule(num_timesteps: int) -> np.ndarray:
    # uncertainty[t-1] = 1 - cos(t / T * pi / 2), t = 1..T   (PCAF_COSINE)
    return np.asarray(
        [1.0 - math.cos(t / num_timesteps * math.pi / 2.0)
         for t in range(1, num_timesteps + 1)],
        dtype=np.float32,
    )


def _pcaf_fused_kernel(prev_ref, hc_ref, u_ref, w_ref, out_ref):
    # prev_ref / u_ref / out_ref: [bt, L]   hc_ref: [1, L]   w_ref: [L, L]
    # w_ref already has -I folded in (w_eff = kron(I_P, W - I_D)), so
    #   z = model_output - prev = prev @ w_eff + hc
    prev = prev_ref[...]
    z = jnp.dot(prev, w_ref[...], preferred_element_type=jnp.float32) + hc_ref[...]
    out_ref[...] = prev + u_ref[...] * jnp.tanh(z)


def _pick_packing(D):
    """Return (Dp, P): padded feature width and lane packing factor, L = P*Dp."""
    if D % 128 == 0:
        return D, 1
    if D <= 128:
        Dp = 1 << max(0, (D - 1).bit_length())   # next power of two, divides 128
        return Dp, 128 // Dp
    return ((D + 127) // 128) * 128, 1


def _pick_bt(tp, target=1024):
    """Largest divisor of tp that is <= target and sublane-aligned (or tp itself)."""
    if tp <= target:
        return tp
    best = 0
    d = 1
    while d * d <= tp:
        if tp % d == 0:
            for cand in (d, tp // d):
                if cand <= target and cand % 8 == 0 and cand > best:
                    best = cand
        d += 1
    # TODO(synk): mask a ragged tail in-kernel instead of one oversized block.
    return best if best > 0 else tp


def model_wrapper_forward(prev_pred, cond, w, wc, b, uncertainty):
    """prev_pred: [B, T, D] f32, cond: [B, C] f32 -> {"RELATIVE_ROTS": [B, T, D]}."""
    B, T, D = prev_pred.shape
    f32 = jnp.float32
    prev_pred = prev_pred.astype(f32)

    # PredictionInputType.CLEAN -> model_input = prev_pred
    # TODO(synk): PredictionInputType.NONE would use zeros_like(prev_pred);
    #             NOISY raises NotImplementedError in the reference.

    # Tiny conditioning projection + bias, hoisted out of the kernel.
    hc = cond.astype(f32) @ wc.astype(f32) + b.astype(f32)[None, :]      # [B, D]

    # Lane-dense packing: L is always a multiple of 128 (full, unmasked vst).
    Dp, P = _pick_packing(D)
    L = P * Dp
    Tpad = ((T + P - 1) // P) * P      # packed rows never cross a batch edge
    Tp = Tpad // P

    if Dp != D:
        prev_p = jnp.pad(prev_pred, ((0, 0), (0, 0), (0, Dp - D)))
        hc = jnp.pad(hc, ((0, 0), (0, Dp - D)))
        w_p = jnp.pad(w.astype(f32), ((0, Dp - D), (0, Dp - D)))
    else:
        prev_p = prev_pred
        w_p = w.astype(f32)
    if Tpad != T:
        prev_p = jnp.pad(prev_p, ((0, 0), (0, Tpad - T), (0, 0)))

    prev_packed = prev_p.reshape(B, Tp, L)                               # [B, Tp, L]

    # Compact side inputs (no [B, T, D] broadcast materialization):
    #   hc_packed : [B, 1, L]  per batch, ~L*4 bytes re-read per grid step
    #   u_packed  : [Tp, L]    shared by all batches (index_map ignores batch)
    hc_packed = jnp.tile(hc, (1, P)).reshape(B, 1, L)
    u = uncertainty.astype(f32)
    if Tpad != T:
        u = jnp.pad(u, (0, Tpad - T))          # padded timesteps contribute 0
    u_packed = jnp.broadcast_to(u.reshape(Tp, P, 1), (Tp, P, Dp)).reshape(Tp, L)

    # Fold "- prev" into the weight: z = prev @ (W - I) + hc.
    w_block = w_p - jnp.eye(Dp, dtype=f32)
    w_eff = jnp.kron(jnp.eye(P, dtype=f32), w_block) if P > 1 else w_block   # [L, L]

    # Row tiling: divisor of Tp, target 1024 rows (amortizes per-step overhead,
    # stays well inside VMEM at L=128).
    bt = _pick_bt(Tp, target=1024)
    # v7x: ensure >= 2 grid steps so both TensorCores get work when B == 1.
    if B == 1 and bt == Tp and Tp % 16 == 0:
        bt = Tp // 2
    nR = Tp // bt
    grid = (nR, B)     # batch innermost -> u block is not re-fetched across b

    # Single-buffer the grid-invariant weight only when it is large enough to
    # matter for VMEM (v7x: 64 MiB physical / 32 MiB default scoped).
    if L >= 512:
        w_spec = pl.BlockSpec((L, L), lambda i, bb: (0, 0),
                              pipeline_mode=pl.Buffered(1))
    else:
        w_spec = pl.BlockSpec((L, L), lambda i, bb: (0, 0))

    elems = B * Tp * L
    cost = pl.CostEstimate(
        flops=2 * elems * L + 3 * elems,
        transcendentals=elems,
        bytes_accessed=4 * (2 * elems + Tp * L + B * L + L * L),
    )

    # VMEM budget: 3 double-buffered [bt, L] streams + weight + hc (+ headroom).
    vmem_est = 4 * (3 * 2 * bt * L + 2 * L * L + 2 * L) + (2 << 20)
    vmem_limit = int(min(max(vmem_est, 16 << 20), 64 << 20))

    out_packed = pl.pallas_call(
        _pcaf_fused_kernel,
        out_shape=jax.ShapeDtypeStruct((B, Tp, L), f32),
        grid=grid,
        in_specs=[
            pl.BlockSpec((None, bt, L), lambda i, bb: (bb, i, 0)),   # prev (packed)
            pl.BlockSpec((None, 1, L), lambda i, bb: (bb, 0, 0)),    # hc (per batch)
            pl.BlockSpec((bt, L), lambda i, bb: (i, 0)),             # uncertainty
            w_spec,                                                  # block-diag W - I
        ],
        out_specs=pl.BlockSpec((None, bt, L), lambda i, bb: (bb, i, 0)),
        compiler_params=pltpu.CompilerParams(
            dimension_semantics=("parallel", "parallel"),
            vmem_limit_bytes=vmem_limit,
        ),
        cost_estimate=cost,
    )(prev_packed, hc_packed, u_packed, w_eff)

    out = out_packed.reshape(B, Tpad, Dp)[:, :T, :D]
    # TODO(synk): optional bf16 HBM I/O (prev/out) would halve bandwidth on this
    # mem-bound kernel; kept f32 so the output matches the reference exactly.
    return {"RELATIVE_ROTS": out}


def _reference(prev_pred, cond, w, wc, b, uncertainty):
    model_input = prev_pred  # CLEAN
    rel = jnp.einsum("btd,de->bte", model_input, w) + (cond @ wc)[:, None, :] + b
    return prev_pred + uncertainty[None, :, None] * jnp.tanh(rel - prev_pred)


if __name__ == "__main__":
    B, T, D, C = 2, 8, 32, 16   # batch, prediction_length, feature dim, cond dim

    key = jax.random.PRNGKey(0)
    k1, k2, k3, k4, k5 = jax.random.split(key, 5)
    prev_pred = jax.random.normal(k1, (B, T, D), dtype=jnp.float32)
    cond = jax.random.normal(k2, (B, C), dtype=jnp.float32)
    w = jax.random.normal(k3, (D, D), dtype=jnp.float32) * (1.0 / math.sqrt(D))
    wc = jax.random.normal(k4, (C, D), dtype=jnp.float32) * (1.0 / math.sqrt(C))
    b = jax.random.normal(k5, (D,), dtype=jnp.float32) * 0.02
    uncertainty = jnp.asarray(_pcaf_cosine_schedule(T))

    fwd = jax.jit(model_wrapper_forward)
    out = fwd(prev_pred, cond, w, wc, b, uncertainty)
    rel_rots = jax.block_until_ready(out["RELATIVE_ROTS"])

    ref = jax.block_until_ready(_reference(prev_pred, cond, w, wc, b, uncertainty))
    assert rel_rots.shape == (B, T, D)
    assert np.allclose(np.asarray(rel_rots), np.asarray(ref), atol=1e-5, rtol=1e-5)

    print("KERNEL_OK")
</pallas_src>

<mosaic_0001>
module attributes {stable_mosaic.version = 11 : i64} {
  func.func @_pcaf_fused_kernel(%arg0: i32, %arg1: i32, %arg2: memref<1x2x128xf32, #tpu.memory_space<vmem>>, %arg3: memref<1x1x128xf32, #tpu.memory_space<vmem>>, %arg4: memref<2x128xf32, #tpu.memory_space<vmem>>, %arg5: memref<128x128xf32, #tpu.memory_space<vmem>>, %arg6: memref<1x2x128xf32, #tpu.memory_space<vmem>>) attributes {dimension_semantics = [#tpu.dimension_semantics<parallel>, #tpu.dimension_semantics<parallel>], iteration_bounds = array<i64: 1, 2>, scalar_prefetch = 0 : i64, scratch_operands = 0 : i64, tpu.core_type = #tpu.core_type<tc>, window_params = [{transform_indices = @transform_0, window_bounds = array<i64: 1, 2, 128>}, {transform_indices = @transform_1, window_bounds = array<i64: 1, 1, 128>}, {transform_indices = @transform_2, window_bounds = array<i64: 2, 128>}, {pipeline_mode = #tpu.pipeline_mode<synchronous>, transform_indices = @transform_3, window_bounds = array<i64: 128, 128>}, {transform_indices = @transform_4, window_bounds = array<i64: 1, 2, 128>}]} {
    %c0 = arith.constant 0 : index
    %c0_0 = arith.constant 0 : index
    %c0_1 = arith.constant 0 : index
    %0 = vector.load %arg2[%c0, %c0_0, %c0_1] : memref<1x2x128xf32, #tpu.memory_space<vmem>>, vector<1x2x128xf32>
    %1 = vector.shape_cast %0 : vector<1x2x128xf32> to vector<2x128xf32>
    %c0_2 = arith.constant 0 : index
    %c0_3 = arith.constant 0 : index
    %2 = vector.load %arg5[%c0_2, %c0_3] : memref<128x128xf32, #tpu.memory_space<vmem>>, vector<128x128xf32>
    %cst = arith.constant dense<0.000000e+00> : vector<2x128xf32>
    %3 = tpu.matmul %1, %2, %cst {dimension_numbers = #tpu.dot_dimension_numbers<[1], [0], [0], [1], [0, 0, 1, 1], [], []>} : vector<2x128xf32>, vector<128x128xf32>, vector<2x128xf32> -> vector<2x128xf32>
    %c0_4 = arith.constant 0 : index
    %c0_5 = arith.constant 0 : index
    %c0_6 = arith.constant 0 : index
    %4 = vector.load %arg3[%c0_4, %c0_5, %c0_6] : memref<1x1x128xf32, #tpu.memory_space<vmem>>, vector<1x1x128xf32>
    %5 = vector.shape_cast %4 : vector<1x1x128xf32> to vector<1x128xf32>
    %6 = vector.broadcast %5 : vector<1x128xf32> to vector<2x128xf32>
    %7 = arith.addf %3, %6 : vector<2x128xf32>
    %c0_7 = arith.constant 0 : index
    %c0_8 = arith.constant 0 : index
    %8 = vector.load %arg4[%c0_7, %c0_8] : memref<2x128xf32, #tpu.memory_space<vmem>>, vector<2x128xf32>
    %9 = math.tanh %7 : vector<2x128xf32>
    %10 = arith.mulf %8, %9 : vector<2x128xf32>
    %11 = arith.addf %1, %10 : vector<2x128xf32>
    %c0_9 = arith.constant 0 : index
    %c0_10 = arith.constant 0 : index
    %c0_11 = arith.constant 0 : index
    %12 = vector.load %arg6[%c0_9, %c0_10, %c0_11] : memref<1x2x128xf32, #tpu.memory_space<vmem>>, vector<1x2x128xf32>
    %13 = vector.shape_cast %12 : vector<1x2x128xf32> to vector<2x128xf32>
    %14 = vector.shape_cast %11 : vector<2x128xf32> to vector<1x2x128xf32>
    tpu.vector_store %arg6[%c0_9, %c0_10, %c0_11], %14 {strides = array<i32>} : memref<1x2x128xf32, #tpu.memory_space<vmem>>, vector<1x2x128xf32>,
    return
  }
  func.func @transform_0(%arg0: i32, %arg1: i32) -> (i32, i32, i32) {
    %c0_i32 = arith.constant 0 : i32
    %c0_i32_0 = arith.constant 0 : i32
    return %arg1, %arg0, %c0_i32 : i32, i32, i32
  }
  func.func @transform_1(%arg0: i32, %arg1: i32) -> (i32, i32, i32) {
    %c0_i32 = arith.constant 0 : i32
    %c0_i32_0 = arith.constant 0 : i32
    %c0_i32_1 = arith.constant 0 : i32
    return %arg1, %c0_i32, %c0_i32_0 : i32, i32, i32
  }
  func.func @transform_2(%arg0: i32, %arg1: i32) -> (i32, i32) {
    %c0_i32 = arith.constant 0 : i32
    %c0_i32_0 = arith.constant 0 : i32
    return %arg0, %c0_i32 : i32, i32
  }
  func.func @transform_3(%arg0: i32, %arg1: i32) -> (i32, i32) {
    %c0_i32 = arith.constant 0 : i32
    %c0_i32_0 = arith.constant 0 : i32
    %c0_i32_1 = arith.constant 0 : i32
    return %c0_i32, %c0_i32_0 : i32, i32
  }
  func.func @transform_4(%arg0: i32, %arg1: i32) -> (i32, i32, i32) {
    %c0_i32 = arith.constant 0 : i32
    %c0_i32_0 = arith.constant 0 : i32
    return %arg1, %arg0, %c0_i32 : i32, i32, i32
  }
}

</mosaic_0001>

<llo_original>
// kernel: model_wrapper_forward.1
$region0: #{model_wrapper_forward.1}
  #allocation0 [shape = 'u32[]', space=smem, size = 0x4, offset = 0x4, fixed_abs, tag = 'smem constant byte address 0x4 - core index']
  #allocation1 [shape = 'u32[72,128]{1,0:T(1,128)}', space=vmem, size = 0x9000, scoped, tag = 'internal scratch']
  %s0 = inlined_call_operand.vmem [shape: f32[2,2,128], index: 0, kind: input, shape index: {}]
  %s1 = inlined_call_operand.vmem [shape: f32[2,1,128], index: 1, kind: input, shape index: {}]
  %s2 = inlined_call_operand.vmem [shape: f32[2,128], index: 2, kind: input, shape index: {}]
  %s3 = inlined_call_operand.vmem [shape: f32[128,128], index: 3, kind: input, shape index: {}]
  %s4 = inlined_call_operand.vmem [shape: f32[2,2,128], index: 4, kind: output, shape index: {}]
  %s5 = sld [smem:[#allocation0]]
  $region49: #{model_wrapper_forward.1} parent=0
    _
  %s7 = ssub.s32 1, %s5
  %s8 = scalar_select 0, %s7, %s5
  loop: start=0, step=1, limit=4
  $region2: #{model_wrapper_forward.1} parent=0 // loop_pre_header
    _
  $region3: #{model_wrapper_forward.1} parent=0 // loop_header
    %s10 = sphi 0, %s14
    %p11 = scmp.ge.s32.totalorder %s10, 4
    %s17 = sphi 0, %s29
    %s18 = sphi 0, %s25
    %s19 = sphi 0, %s17
    %s20 = sphi 0, %s18
    %s21 = sphi 0, %s19
    %s22 = sphi 0, %s20
    %s34 = sphi 0, %s36
    %s37 = sphi 0, %s34
    %s38 = sphi 0, %s37
    %s54 = sphi 0, %s38
    %s60 = sphi 0, %s62
    %s63 = sphi 0, %s60
    %s64 = sphi 0, %s63
    %s80 = sphi 0, %s64
    %s86 = sphi 0, %s88
    %s89 = sphi 0, %s86
    %s90 = sphi 0, %s89
    %s106 = sphi 0, %s90
    %s110 = sphi 0, %s110
    %s112 = sphi 0, %s110
    %s113 = sphi 0, %s112
    %s127 = sphi 0, %s113
    %s135 = sphi 0, %s137
    %s138 = sphi 0, %s135
    %s139 = sphi 0, %s138
    %s155 = sphi 0, %s139
  $region4: #{model_wrapper_forward.1} parent=0 // loop_header_branch
    %13 = sbr.rel (%p11) target = $region8
  $region5: #{model_wrapper_forward.1} parent=0 // loop_body
    %s15 = ssub.s32 %s10, 1
    %s16 = ssub.s32 %s10, 2
    %s23 = sadd.s32 1, %s18
    %p24 = scmp.ge.s32.totalorder %s23, 2
    %s25 = scalar_select %p24, 0, %s23
    %s26 = sadd.s32 1, %s17
    %s27 = scalar_select %p24, %s26, %s17
    %p28 = scmp.ge.s32.totalorder %s27, 1
    %s29 = scalar_select %p28, 0, %s27
    %s30 = ssub.s32 %s18, %s25
    %s31 = ssub.s32 %s17, %s29
    %s32 = sor.u32 %s30, %s31
    %p33 = scmp.eq.s32.totalorder %s32, 0
    %s35 = sadd.s32 %s34, 1
    %s36 = scalar_select %p33, %s34, %s35
    %p39 = pneg %p33
    %p40 = scmp.eq.s32.totalorder %s10, 1
    %p41 = por %p39, %p40
    %p42 = scmp.ne.s32.totalorder %s34, %s37
    %p43 = scmp.eq.s32.totalorder %s10, 0
    %p44 = por %p42, %p43
    %p45 = scmp.ne.s32.totalorder %s34, %s37
    %p46 = scmp.eq.s32.totalorder %s15, 1
    %p47 = por %p45, %p46
    %p48 = scmp.ne.s32.totalorder %s37, %s38
    %p49 = scmp.eq.s32.totalorder %s15, 0
    %p50 = por %p48, %p49
    %p51 = scmp.ne.s32.totalorder %s37, %s38
    %p52 = scmp.eq.s32.totalorder %s16, 1
    %p53 = por %p51, %p52
    %p55 = scmp.ne.s32.totalorder %s38, %s54
    %p56 = scmp.eq.s32.totalorder %s16, 0
    %p57 = por %p55, %p56
    %s58 = ssub.s32 %s18, %s25
    %p59 = scmp.eq.s32.totalorder %s58, 0
    %s61 = sadd.s32 %s60, 1
    %s62 = scalar_select %p59, %s60, %s61
    %p65 = pneg %p59
    %p66 = scmp.eq.s32.totalorder %s10, 1
    %p67 = por %p65, %p66
    %p68 = scmp.ne.s32.totalorder %s60, %s63
    %p69 = scmp.eq.s32.totalorder %s10, 0
    %p70 = por %p68, %p69
    %p71 = scmp.ne.s32.totalorder %s60, %s63
    %p72 = scmp.eq.s32.totalorder %s15, 1
    %p73 = por %p71, %p72
    %p74 = scmp.ne.s32.totalorder %s63, %s64
    %p75 = scmp.eq.s32.totalorder %s15, 0
    %p76 = por %p74, %p75
    %p77 = scmp.ne.s32.totalorder %s63, %s64
    %p78 = scmp.eq.s32.totalorder %s16, 1
    %p79 = por %p77, %p78
    %p81 = scmp.ne.s32.totalorder %s64, %s80
    %p82 = scmp.eq.s32.totalorder %s16, 0
    %p83 = por %p81, %p82
    %s84 = ssub.s32 %s17, %s29
    %p85 = scmp.eq.s32.totalorder %s84, 0
    %s87 = sadd.s32 %s86, 1
    %s88 = scalar_select %p85, %s86, %s87
    %p91 = pneg %p85
    %p92 = scmp.eq.s32.totalorder %s10, 1
    %p93 = por %p91, %p92
    %p94 = scmp.ne.s32.totalorder %s86, %s89
    %p95 = scmp.eq.s32.totalorder %s10, 0
    %p96 = por %p94, %p95
    %p97 = scmp.ne.s32.totalorder %s86, %s89
    %p98 = scmp.eq.s32.totalorder %s15, 1
    %p99 = por %p97, %p98
    %p100 = scmp.ne.s32.totalorder %s89, %s90
    %p101 = scmp.eq.s32.totalorder %s15, 0
    %p102 = por %p100, %p101
    %p103 = scmp.ne.s32.totalorder %s89, %s90
    %p104 = scmp.eq.s32.totalorder %s16, 1
    %p105 = por %p103, %p104
    %p107 = scmp.ne.s32.totalorder %s90, %s106
    %p108 = scmp.eq.s32.totalorder %s16, 0
    %p109 = por %p107, %p108
    %s111 = sadd.s32 %s110, 1
    %p114 = scmp.eq.s32.totalorder %s10, 1
    %p115 = scmp.ne.s32.totalorder %s110, %s112
    %p116 = scmp.eq.s32.totalorder %s10, 0
    %p117 = por %p115, %p116
    %p118 = scmp.ne.s32.totalorder %s110, %s112
    %p119 = scmp.eq.s32.totalorder %s15, 1
    %p120 = por %p118, %p119
    %p121 = scmp.ne.s32.totalorder %s112, %s113
    %p122 = scmp.eq.s32.totalorder %s15, 0
    %p123 = por %p121, %p122
    %p124 = scmp.ne.s32.totalorder %s112, %s113
    %p125 = scmp.eq.s32.totalorder %s16, 1
    %p126 = por %p124, %p125
    %p128 = scmp.ne.s32.totalorder %s113, %s127
    %p129 = scmp.eq.s32.totalorder %s16, 0
    %p130 = por %p128, %p129
    %s131 = ssub.s32 %s18, %s25
    %s132 = ssub.s32 %s17, %s29
    %s133 = sor.u32 %s131, %s132
    %p134 = scmp.eq.s32.totalorder %s133, 0
    %s136 = sadd.s32 %s135, 1
    %s137 = scalar_select %p134, %s135, %s136
    %p140 = pneg %p134
    %p141 = scmp.eq.s32.totalorder %s10, 1
    %p142 = por %p140, %p141
    %p143 = scmp.ne.s32.totalorder %s135, %s138
    %p144 = scmp.eq.s32.totalorder %s10, 0
    %p145 = por %p143, %p144
    %p146 = scmp.ne.s32.totalorder %s135, %s138
    %p147 = scmp.eq.s32.totalorder %s15, 1
    %p148 = por %p146, %p147
    %p149 = scmp.ne.s32.totalorder %s138, %s139
    %p150 = scmp.eq.s32.totalorder %s15, 0
    %p151 = por %p149, %p150
    %p152 = scmp.ne.s32.totalorder %s138, %s139
    %p153 = scmp.eq.s32.totalorder %s16, 1
    %p154 = por %p152, %p153
    %p156 = scmp.ne.s32.totalorder %s139, %s155
    %p157 = scmp.eq.s32.totalorder %s16, 0
    %p158 = por %p156, %p157
    %p159 = scmp.le.s32.totalorder 1, %s10
    %p160 = scmp.lt.s32.totalorder %s10, 3
    %p161 = pnand %p159, %p160
    %p162 = pneg %p161
    // Predicated region
    $region9: #{model_wrapper_forward.1} parent=5 // pred_check
      _
    $region10: #{model_wrapper_forward.1} parent=5 // pred_check_branch
      %164 = sbr.rel (%p161) target = $region12
    $region11: #{model_wrapper_forward.1} parent=5 // pred_region
      %s165 = ssub.s32 %s10, 1
      // Predicated region
      $region13: #{model_wrapper_forward.1} parent=11 // pred_check
        %p166 = pneg %p102
      $region14: #{model_wrapper_forward.1} parent=11 // pred_check_branch
        %168 = sbr.rel (%p166) target = $region16
      $region15: #{model_wrapper_forward.1} parent=11 // pred_region
        %p169 = scmp.lt.s32.totalorder %s19, 0
        %s170 = scalar_select %p169, %s19, 0
        %s171 = smul.addr %s170, 2
        %s172 = scalar_lea.vmem %s2, %s171
      $region16: #{model_wrapper_forward.1} parent=11 // pred_fallthru
        _
      // Predicated region
      $region17: #{model_wrapper_forward.1} parent=11 // pred_check
        %p173 = pneg %p123
      $region18: #{model_wrapper_forward.1} parent=11 // pred_check_branch
        %175 = sbr.rel (%p173) target = $region20
      $region19: #{model_wrapper_forward.1} parent=11 // pred_region
        _
      $region20: #{model_wrapper_forward.1} parent=11 // pred_fallthru
        _
    $region12: #{model_wrapper_forward.1} parent=5 // pred_fallthru
      _
    %p176 = scmp.lt.s32.totalorder %s10, 2
    // Predicated region
    $region21: #{model_wrapper_forward.1} parent=5 // pred_check
      %p177 = pneg %p176
    $region22: #{model_wrapper_forward.1} parent=5 // pred_check_branch
      %179 = sbr.rel (%p177) target = $region24
    $region23: #{model_wrapper_forward.1} parent=5 // pred_region
      // Predicated region
      $region25: #{model_wrapper_forward.1} parent=23 // pred_check
        %p180 = pneg %p44
      $region26: #{model_wrapper_forward.1} parent=23 // pred_check_branch
        %182 = sbr.rel (%p180) target = $region28
      $region27: #{model_wrapper_forward.1} parent=23 // pred_region
        %p183 = scmp.lt.s32.totalorder %s18, 1
        %s184 = scalar_select %p183, %s18, 1
        %p185 = scmp.lt.s32.totalorder %s17, 0
        %s186 = scalar_select %p185, %s17, 0
        %s187 = sadd.s32 %s186, %s184
        %s188 = smul.addr %s187, 2
        %s189 = scalar_lea.vmem %s0, %s188
      $region28: #{model_wrapper_forward.1} parent=23 // pred_fallthru
        _
      // Predicated region
      $region29: #{model_wrapper_forward.1} parent=23 // pred_check
        %p190 = pneg %p70
      $region30: #{model_wrapper_forward.1} parent=23 // pred_check_branch
        %192 = sbr.rel (%p190) target = $region32
      $region31: #{model_wrapper_forward.1} parent=23 // pred_region
        %p193 = scmp.lt.s32.totalorder %s18, 1
        %s194 = scalar_select %p193, %s18, 1
        %s195 = scalar_lea.vmem %s1, %s194
      $region32: #{model_wrapper_forward.1} parent=23 // pred_fallthru
        _
    $region24: #{model_wrapper_forward.1} parent=5 // pred_fallthru
      _
    %p196 = scmp.le.s32.totalorder 1, %s10
    %p197 = scmp.lt.s32.totalorder %s10, 3
    %p198 = pnand %p196, %p197
    %p199 = pneg %p198
    // Predicated region
    $region33: #{model_wrapper_forward.1} parent=5 // pred_check
      _
    $region34: #{model_wrapper_forward.1} parent=5 // pred_check_branch
      %201 = sbr.rel (%p198) target = $region36
    $region35: #{model_wrapper_forward.1} parent=5 // pred_region
      %s202 = ssub.s32 %s10, 1
      %p203 = scmp.lt.s32.totalorder %s20, 1
      %s204 = scalar_select %p203, %s20, 1
      %p205 = scmp.lt.s32.totalorder %s19, 0
      %s206 = scalar_select %p205, %s19, 0
      %s207 = sadd.s32 %s206, %s204
      %s208 = smul.addr %s207, 2
      %s209 = scalar_lea.vmem %s0, %s208
      %p210 = pneg %p50
      %p211 = pneg %p47
      %p212 = scmp.lt.s32.totalorder %s20, 1
      %s213 = scalar_select %p212, %s20, 1
      %s214 = scalar_lea.vmem %s1, %s213
      %p215 = pneg %p76
      %p216 = pneg %p73
      %p217 = scmp.lt.s32.totalorder %s19, 0
      %s218 = scalar_select %p217, %s19, 0
      %s219 = smul.addr %s218, 2
      %s220 = scalar_lea.vmem %s2, %s219
      %p221 = pneg %p102
      %p222 = pneg %p99
      %p223 = pneg %p123
      %p224 = pneg %p120
      %p225 = pneg %p151
      %p226 = pneg %p148
      %p227 = scmp.lt.s32.totalorder %s20, 1
      %s228 = scalar_select %p227, %s20, 1
      %p229 = scmp.lt.s32.totalorder %s19, 0
      %s230 = scalar_select %p229, %s19, 0
      %s231 = sadd.s32 %s230, %s228
      %s232 = smul.addr %s231, 2
      %s233 = scalar_lea.vmem %s4, %s232
      %p234 = scmp.lt.s32.totalorder %s20, 1
      %s235 = scalar_select %p234, %s20, 1
      %p236 = scmp.lt.s32.totalorder %s19, 0
      %s237 = scalar_select %p236, %s19, 0
      %s238 = sadd.s32 %s237, %s235
      %s239 = smul.addr %s238, 2
      %s240 = scalar_lea.vmem %s0, %s239
      %p241 = scmp.lt.s32.totalorder %s20, 1
      %s242 = scalar_select %p241, %s20, 1
      %s243 = scalar_lea.vmem %s1, %s242
      %p244 = scmp.lt.s32.totalorder %s19, 0
      %s245 = scalar_select %p244, %s19, 0
      %s246 = smul.addr %s245, 2
      %s247 = scalar_lea.vmem %s2, %s246
      %p248 = scmp.lt.s32.totalorder %s20, 1
      %s249 = scalar_select %p248, %s20, 1
      %p250 = scmp.lt.s32.totalorder %s19, 0
      %s251 = scalar_select %p250, %s19, 0
      %s252 = sadd.s32 %s251, %s249
      %s253 = smul.addr %s252, 2
      %s254 = scalar_lea.vmem %s4, %s253
      %v255 = vld [vmem:[%s240] sm:$0x3]
      %v256 = vld [vmem:[%s3] sm:$0xff]
      %v257 = vld [vmem:[%s3 + $0x8] sm:$0xff]
      %v258 = vld [vmem:[%s3 + $0x10] sm:$0xff]
      %v259 = vld [vmem:[%s3 + $0x18] sm:$0xff]
      %v260 = vld [vmem:[%s3 + $0x20] sm:$0xff]
      %v261 = vld [vmem:[%s3 + $0x28] sm:$0xff]
      %v262 = vld [vmem:[%s3 + $0x30] sm:$0xff]
      %v263 = vld [vmem:[%s3 + $0x38] sm:$0xff]
      %v264 = vld [vmem:[%s3 + $0x40] sm:$0xff]
      %v265 = vld [vmem:[%s3 + $0x48] sm:$0xff]
      %v266 = vld [vmem:[%s3 + $0x50] sm:$0xff]
      %v267 = vld [vmem:[%s3 + $0x58] sm:$0xff]
      %v268 = vld [vmem:[%s3 + $0x60] sm:$0xff]
      %v269 = vld [vmem:[%s3 + $0x68] sm:$0xff]
      %v270 = vld [vmem:[%s3 + $0x70] sm:$0xff]
      %v271 = vld [vmem:[%s3 + $0x78] sm:$0xff]
      %v272 = vld [vmem:[%s243] sm:$0x1]
      %v274 = vperm.slane %v272, 0
      %276 = vmatpush.msra.mxu0 %v271
      %277 = vmatpush.msra.mxu0 %v270
      %278 = vmatpush.msra.mxu0 %v269
      %279 = vmatpush.msra.mxu0 %v268
      %280 = vmatpush.msra.mxu0 %v267
      %281 = vmatpush.msra.mxu0 %v266
      %282 = vmatpush.msra.mxu0 %v265
      %283 = vmatpush.msra.mxu0 %v264
      %284 = vmatpush.msra.mxu0 %v263
      %285 = vmatpush.msra.mxu0 %v262
      %286 = vmatpush.msra.mxu0 %v261
      %287 = vmatpush.msra.mxu0 %v260
      %288 = vmatpush.msra.mxu0 %v259
      %289 = vmatpush.msra.mxu0 %v258
      %290 = vmatpush.msra.mxu0 %v257
      %291 = vmatpush.msra.mxu0 %v256
      %292 = vmatmul.f32.gmra.mxu0 %v255
      %v293 = vpop.f32.mrf.mxu0
      %v294 = vadd.f32 %v274, %v293
      %295 = vdwg.mxu0
      %v296 = vld [vmem:[%s247] sm:$0x3]
      %v297 = vtanh.pop %v294
      %v298 = vmul.f32 %v296, %v297
      %v299 = vadd.f32 %v255, %v298
      %300 = vst [vmem:[%s254] sm:$0x3] %v299
      %p301 = scmp.lt.s32.totalorder %s20, 1
      %s302 = scalar_select %p301, %s20, 1
      %p303 = scmp.lt.s32.totalorder %s19, 0
      %s304 = scalar_select %p303, %s19, 0
      %s305 = sadd.s32 %s304, %s302
      %s306 = smul.addr %s305, 2
      %s307 = scalar_lea.vmem %s4, %s306
      // Predicated region
      $region37: #{model_wrapper_forward.1} parent=35 // pred_check
        %p308 = pneg %p148
      $region38: #{model_wrapper_forward.1} parent=35 // pred_check_branch
        %310 = sbr.rel (%p308) target = $region40
      $region39: #{model_wrapper_forward.1} parent=35 // pred_region
        _
      $region40: #{model_wrapper_forward.1} parent=35 // pred_fallthru
        _
    $region36: #{model_wrapper_forward.1} parent=5 // pred_fallthru
      _
    %p311 = scmp.le.s32.totalorder 2, %s10
    // Predicated region
    $region41: #{model_wrapper_forward.1} parent=5 // pred_check
      %p312 = pneg %p311
    $region42: #{model_wrapper_forward.1} parent=5 // pred_check_branch
      %314 = sbr.rel (%p312) target = $region44
    $region43: #{model_wrapper_forward.1} parent=5 // pred_region
      %s315 = ssub.s32 %s10, 2
      // Predicated region
      $region45: #{model_wrapper_forward.1} parent=43 // pred_check
        %p316 = pneg %p154
      $region46: #{model_wrapper_forward.1} parent=43 // pred_check_branch
        %318 = sbr.rel (%p316) target = $region48
      $region47: #{model_wrapper_forward.1} parent=43 // pred_region
        %p319 = scmp.lt.s32.totalorder %s22, 1
        %s320 = scalar_select %p319, %s22, 1
        %p321 = scmp.lt.s32.totalorder %s21, 0
        %s322 = scalar_select %p321, %s21, 0
        %s323 = sadd.s32 %s322, %s320
        %s324 = smul.addr %s323, 2
        %s325 = scalar_lea.vmem %s4, %s324
      $region48: #{model_wrapper_forward.1} parent=43 // pred_fallthru
        _
    $region44: #{model_wrapper_forward.1} parent=5 // pred_fallthru
      _
  $region6: #{model_wrapper_forward.1} parent=0 // loop_footer
    %s14 = sadd.s32 1, %s10
  $region7: #{model_wrapper_forward.1} parent=0 // loop_footer_branch
    %9 = sbr.rel target = $region3
  $region8: #{model_wrapper_forward.1} parent=0 // loop_exit
    _

</llo_original>
